<compile_context>
chip_gen: v7x
topology: tpu7x:2x2x1
jax: 0.10.0
libtpu: 0.0.40
codegen_flags: <defaults>
</compile_context>

<pallas_src>
import jax
import jax.numpy as jnp
from jax.experimental import pallas as pl
from jax.experimental.pallas import tpu as pltpu

_LANE = 128
_MIN_GRID_STEPS = 4  # 2 TCs (v7x) x 2 steps each for balanced streaming.


def _squared_relu_kernel(x_ref, o_ref):
    x = x_ref[...]
    r = jnp.maximum(x, 0)
    o_ref[...] = r * r


def _sublane_multiple(dtype) -> int:
    itemsize = jnp.dtype(dtype).itemsize
    if itemsize >= 4:
        return 8
    if itemsize == 2:
        return 16
    return 32


def _physical_vmem_bytes() -> int:
    """Best-effort physical VMEM query; conservative (v7x-sized) fallback."""
    try:
        info = pltpu.get_tpu_info()
        cap = int(getattr(info, "vmem_capacity_bytes", 0))
        if cap > 0:
            return cap
    except Exception:
        pass
    return 64 << 20


def _target_block_bytes(vmem_cap: int) -> int:
    if vmem_cap >= (96 << 20):   # v5e / v6e: 128 MiB physical VMEM
        return 8 << 20
    if vmem_cap >= (48 << 20):   # v7x: 64 MiB physical VMEM per TC
        return 6 << 20
    return 4 << 20               # unknown / small: stay conservative


def _run_kernel_flat(flat: jax.Array, donate_input: bool = False) -> jax.Array:
    """Kernel path for a flat array whose length is a multiple of 128."""
    n = flat.shape[0]
    dtype = flat.dtype
    itemsize = jnp.dtype(dtype).itemsize
    sub = _sublane_multiple(dtype)

    # Widest lane-dense width (multiple of 128) that divides N exactly:
    # reshape is free plumbing, stores are fully unmasked.
    lane_width = _LANE
    for cand in (8192, 4096, 2048, 1024, 512, 256):
        if n % cand == 0:
            lane_width = cand
            break
    rows = n // lane_width
    bytes_per_row = lane_width * itemsize

    vmem_cap = _physical_vmem_bytes()
    target_block_bytes = _target_block_bytes(vmem_cap)

    br = max(1, target_block_bytes // bytes_per_row)

    # Ensure >= _MIN_GRID_STEPS grid steps whenever there is enough data to
    # split usefully, so both v7x TensorCores get work.
    if rows >= _MIN_GRID_STEPS * sub:
        br = min(br, pl.cdiv(rows, _MIN_GRID_STEPS))

    if br >= rows:
        br = rows  # single full-extent block (small input)
    else:
        br = max(sub, (br // sub) * sub)

    block_bytes = br * bytes_per_row
    # 1 input + 1 output, each double-buffered -> 4 block buffers, plus slack.
    vmem_limit = 4 * block_bytes + (4 << 20)
    vmem_limit = max(16 << 20, min(vmem_limit, vmem_cap // 2))

    x2 = flat.reshape(rows, lane_width)
    grid = (pl.cdiv(rows, br),)

    out = pl.pallas_call(
        _squared_relu_kernel,
        out_shape=jax.ShapeDtypeStruct((rows, lane_width), dtype),
        grid_spec=pltpu.PrefetchScalarGridSpec(
            num_scalar_prefetch=0,
            grid=grid,
            in_specs=[pl.BlockSpec((br, lane_width), lambda i: (i, 0))],
            out_specs=pl.BlockSpec((br, lane_width), lambda i: (i, 0)),
        ),
        compiler_params=pltpu.CompilerParams(
            dimension_semantics=("parallel",),
            vmem_limit_bytes=int(vmem_limit),
        ),
        cost_estimate=pl.CostEstimate(
            flops=2 * n,
            bytes_accessed=2 * n * itemsize,
            transcendentals=0,
        ),
        # Aliasing is safe here (identical in/out index_map, pure streaming);
        # only enable when the caller actually donates the buffer.
        input_output_aliases=({0: 0} if donate_input else {}),
    )(x2)
    return out.reshape(-1)


def squared_relu(x: jax.Array, donate_input: bool = False) -> jax.Array:
    """Elementwise squared ReLU via Pallas. Works for any shape/dtype."""
    orig_shape = x.shape
    n = x.size
    if n == 0:
        return x

    flat = x.reshape(-1)
    n_main = (n // _LANE) * _LANE

    if n_main == 0:
        # Sub-128-element input: plain jnp is cheaper than any kernel launch.
        r = jnp.maximum(flat, 0)
        return (r * r).reshape(orig_shape)

    if n_main == n:
        return _run_kernel_flat(flat, donate_input).reshape(orig_shape)

    # Ragged tail: kernel on the 128-aligned prefix, tiny tail in plain jnp.
    # Avoids the full-array pad + trailing-slice HBM round trips.
    main_out = _run_kernel_flat(flat[:n_main], donate_input=False)
    tail = flat[n_main:]
    rt = jnp.maximum(tail, 0)
    out_flat = jnp.concatenate([main_out, rt * rt])
    return out_flat.reshape(orig_shape)


if __name__ == "__main__":
    key = jax.random.PRNGKey(0)
    # NCHW-style activation tensor consistent with typical conv usage.
    x = jax.random.normal(key, (2, 4, 16, 16), dtype=jnp.float32)

    y = squared_relu(x)
    jax.block_until_ready(y)

    # Correctness check against plain JAX reference: relu(x) * relu(x).
    y_ref = jnp.square(jnp.maximum(x, 0.0))
    assert y.shape == x.shape and y.dtype == x.dtype
    assert jnp.allclose(y, y_ref, atol=1e-6, rtol=1e-6)

    # Also exercise a ragged size (N % 128 != 0) to cover the prefix+tail path.
    x2 = jax.random.normal(jax.random.PRNGKey(1), (3, 5, 7), dtype=jnp.float32)
    y2 = squared_relu(x2)
    jax.block_until_ready(y2)
    assert jnp.allclose(y2, jnp.square(jnp.maximum(x2, 0.0)), atol=1e-6, rtol=1e-6)

    print("KERNEL_OK")
</pallas_src>

<mosaic_0001>
module attributes {stable_mosaic.version = 11 : i64} {
  func.func @_squared_relu_kernel(%arg0: i32, %arg1: memref<1x2048xf32, #tpu.memory_space<vmem>>, %arg2: memref<1x2048xf32, #tpu.memory_space<vmem>>) attributes {dimension_semantics = [#tpu.dimension_semantics<parallel>], iteration_bounds = array<i64: 1>, scalar_prefetch = 0 : i64, scratch_operands = 0 : i64, tpu.core_type = #tpu.core_type<tc>, window_params = [{transform_indices = @transform_0, window_bounds = array<i64: 1, 2048>}, {transform_indices = @transform_1, window_bounds = array<i64: 1, 2048>}]} {
    %c0 = arith.constant 0 : index
    %c0_0 = arith.constant 0 : index
    %0 = vector.load %arg1[%c0, %c0_0] : memref<1x2048xf32, #tpu.memory_space<vmem>>, vector<1x2048xf32>
    %cst = arith.constant 0.000000e+00 : f32
    %1 = vector.broadcast %cst : f32 to vector<1x2048xf32>
    %2 = arith.maximumf %0, %1 : vector<1x2048xf32>
    %3 = arith.mulf %2, %2 : vector<1x2048xf32>
    %c0_1 = arith.constant 0 : index
    %c0_2 = arith.constant 0 : index
    %4 = vector.load %arg2[%c0_1, %c0_2] : memref<1x2048xf32, #tpu.memory_space<vmem>>, vector<1x2048xf32>
    tpu.vector_store %arg2[%c0_1, %c0_2], %3 {strides = array<i32>} : memref<1x2048xf32, #tpu.memory_space<vmem>>, vector<1x2048xf32>,
    return
  }
  func.func @transform_0(%arg0: i32) -> (i32, i32) {
    %c0_i32 = arith.constant 0 : i32
    %c0_i32_0 = arith.constant 0 : i32
    return %arg0, %c0_i32 : i32, i32
  }
  func.func @transform_1(%arg0: i32) -> (i32, i32) {
    %c0_i32 = arith.constant 0 : i32
    %c0_i32_0 = arith.constant 0 : i32
    return %arg0, %c0_i32 : i32, i32
  }
}

</mosaic_0001>

<llo_original>
// kernel: tpu_custom_call.1
$region0: #{tpu_custom_call.1}
  #allocation0 [shape = 'u32[]', space=smem, size = 0x4, offset = 0x4, fixed_abs, tag = 'smem constant byte address 0x4 - core index']
  #allocation1 [shape = 'u32[144,128]{1,0:T(1,128)}', space=vmem, size = 0x12000, scoped, tag = 'internal scratch']
  %s0 = inlined_call_operand.hbm [shape: f32[1,2048], index: 0, kind: input, shape index: {}]
  %s1 = inlined_call_operand.hbm [shape: f32[1,2048], index: 1, kind: output, shape index: {}]
  %s2 = sld [smem:[#allocation0]]
  $region18: #{tpu_custom_call.1} parent=0
    _
  %s4 = ssub.s32 1, %s2
  %s5 = scalar_select 0, %s4, %s2
  $region1: #{tpu_custom_call.1} parent=0
    #allocation2 [shape = 'u8[8192]{0}', space=vmem, size = 0x2000, scoped, tag = 'input window, operand 0, single buffered']
    #allocation3 [shape = 's32[1]{0}', space=sflag, size = 0x4, scoped, tag = 'scoped memory for tpu_custom_call.1']
    #allocation4 [shape = 's32[1]{0}', space=sflag, size = 0x4, scoped, tag = 'scoped memory for tpu_custom_call.1']
    #allocation5 [shape = 'u8[8192]{0}', space=vmem, size = 0x2000, scoped, tag = 'output window, operand 0, single buffered']
    %6 = vsyncpa [#allocation3], 0
    %7 = vsyncpa [#allocation4], 0
    // Predicated region
    $region2: #{tpu_custom_call.1} parent=1 // pred_check
      _
    $region3: #{tpu_custom_call.1} parent=1 // pred_check_branch
      %9 = sbr.rel (0) target = $region5
    $region4: #{tpu_custom_call.1} parent=1 // pred_region
      %s11 = ssub.s32 256, 256
      %12 = vsyncadd [#allocation3], %s11
      %s14 = sshll.u32 [#allocation2], 4
      %s15 = int_to_ptr.vmem [resolvable:$true] %s14
      %17 = dma.hbm_to_vmem [thread:$0]  %s0, 256, %s15, [#allocation3]
    $region5: #{tpu_custom_call.1} parent=1 // pred_fallthru
      _
    // Predicated region
    $region6: #{tpu_custom_call.1} parent=1 // pred_check
      _
    $region7: #{tpu_custom_call.1} parent=1 // pred_check_branch
      %19 = sbr.rel (0) target = $region9
    $region8: #{tpu_custom_call.1} parent=1 // pred_region
      %20 = dma.done [#allocation3], 256
    $region9: #{tpu_custom_call.1} parent=1 // pred_fallthru
      _
    %v21 = vld [vmem:[#allocation2] sm:$0xff]
    %v22 = vld [vmem:[#allocation2 + $0x8] sm:$0xff]
    %v23 = vmax.f32 %v21, 0.0
    %v24 = vmax.f32 %v22, 0.0
    %v25 = vmul.f32 %v23, %v23
    %v26 = vmul.f32 %v24, %v24
    %27 = vst [vmem:[#allocation5] sm:$0xff] %v25
    %28 = vst [vmem:[#allocation5 + $0x8] sm:$0xff] %v26
    // Predicated region
    $region10: #{tpu_custom_call.1} parent=1 // pred_check
      _
    $region11: #{tpu_custom_call.1} parent=1 // pred_check_branch
      %30 = sbr.rel (0) target = $region13
    $region12: #{tpu_custom_call.1} parent=1 // pred_region
      %s32 = ssub.s32 256, 256
      %33 = vsyncadd [#allocation4], %s32
      %s35 = sshll.u32 [#allocation5], 4
      %s36 = int_to_ptr.vmem [resolvable:$true] %s35
      %38 = dma.vmem_to_hbm [thread:$0]  %s36, 256, %s1, [#allocation4]
    $region13: #{tpu_custom_call.1} parent=1 // pred_fallthru
      _
    // Predicated region
    $region14: #{tpu_custom_call.1} parent=1 // pred_check
      _
    $region15: #{tpu_custom_call.1} parent=1 // pred_check_branch
      %40 = sbr.rel (0) target = $region17
    $region16: #{tpu_custom_call.1} parent=1 // pred_region
      %41 = dma.done [#allocation4], 256
    $region17: #{tpu_custom_call.1} parent=1 // pred_fallthru
      _
    %42 = vsyncpa [#allocation3], 1
    %43 = vsyncpa [#allocation4], 1

</llo_original>
